<compile_context>
chip_gen: v7x
topology: tpu7x:2x2x1
jax: 0.10.0
libtpu: 0.0.40
codegen_flags: <defaults>
</compile_context>

<pallas_src>
import jax
import jax.numpy as jnp
from jax import lax
from jax.experimental import pallas as pl
from jax.experimental.pallas import tpu as pltpu

_MiB = 1024 * 1024


def _round_up(a, m):
    return -(-a // m) * m


def _tpu_profile():
    """(physical VMEM bytes per core, #TensorCores per chip), with safe fallbacks."""
    phys = None
    cores = None
    try:
        info = pltpu.get_tpu_info()
        v = getattr(info, "vmem_capacity_bytes", None)
        if v:
            phys = int(v)
        for name in ("num_tensorcores", "tensorcores_per_chip", "num_cores",
                     "cores_per_chip", "num_cores_per_chip"):
            c = getattr(info, name, None)
            if isinstance(c, int) and c > 0:
                cores = c
                break
    except Exception:
        pass
    if phys is None:
        phys = 64 * _MiB                       # conservative: fits every listed gen
    if cores is None:
        cores = 2 if phys <= 64 * _MiB else 1  # 64-MiB-VMEM profile => v7x-like, 2 TCs
    return phys, cores


def _make_mmd_partial_kernel(tb, td, B, needs_b_mask):
    """Per (feature-block, batch-block) step: emit an (8, td) partial sum of x - y."""
    def kernel(x_ref, y_ref, o_ref):
        z = x_ref[...].astype(jnp.float32) - y_ref[...].astype(jnp.float32)
        if needs_b_mask:
            b = pl.program_id(1)
            row = lax.broadcasted_iota(jnp.int32, (tb, 1), 0)
            # select (not multiply): garbage rows may hold NaN/Inf.
            z = jnp.where(b * tb + row < B, z, 0.0)
        if tb % 8 == 0:
            # Fold tb rows -> 8 rows with vreg-aligned sublane-block adds (pure VPU).
            p8 = z[0:8]
            for g in range(1, tb // 8):
                p8 = p8 + z[g * 8:(g + 1) * 8]
        else:
            # Tiny / odd batch that fits one block: full sublane reduce, place the
            # result in sublane 0 of a zeroed (8, td) tile.
            rowsum = jnp.sum(z, axis=0, keepdims=True)           # (1, td)
            sub = lax.broadcasted_iota(jnp.int32, (8, td), 0)
            p8 = jnp.where(sub == 0, rowsum, 0.0)
        o_ref[...] = p8[None, None]                              # (1, 1, 8, td)
    return kernel


def mmd_loss_simple(x, y):
    """Pallas implementation of MMDLossSimple.forward. Returns a scalar (f32)."""
    if x.ndim == 4:
        x = x.reshape(x.shape[0], -1)
        y = y.reshape(y.shape[0], -1)
    assert x.shape == y.shape and x.ndim == 2
    B, D = x.shape
    itemsize = jnp.dtype(x.dtype).itemsize

    vmem_phys, num_tc = _tpu_profile()

    # --- VMEM budget (generation aware) --------------------------------------
    if vmem_phys >= 100 * _MiB:                       # v5e / v6e: 128 MiB per TC
        vmem_limit = 96 * _MiB
    else:                                             # v7x-like: 64 MiB per TC
        vmem_limit = max(32 * _MiB, min(44 * _MiB, vmem_phys - 20 * _MiB))
    usable = vmem_limit - 6 * _MiB                    # headroom for misc scratch

    # --- batch tile -----------------------------------------------------------
    sub_tile = max(8, (8 * 4) // itemsize)            # 8 f32 / 16 bf16 / 32 int8
    tb = B if B <= 128 else 128                       # full-extent or multiple of 8
    tb_pad = _round_up(tb, sub_tile)

    # --- feature tile: as large as the budget allows (no artificial 2048 cap) --
    n_buf = 2                                         # default double buffering
    per_lane = (2 * n_buf * tb_pad * itemsize         # x/y pipeline buffers
                + 2 * tb_pad * 4                      # f32 intermediates (z, casts)
                + n_buf * 8 * 4 + 32)                 # output buffers + slack
    TD_MAX = 16384
    td_cap = max(128, min(TD_MAX, (usable // per_lane) // 128 * 128))
    td = D if D <= td_cap else td_cap                 # full-extent or multiple of 128
    grid_d = pl.cdiv(D, td)
    grid_b = pl.cdiv(B, tb)

    # --- make sure a multi-TensorCore chip has blocks to split -----------------
    if num_tc > 1 and grid_d * grid_b < 2 * num_tc:
        want = 2 * num_tc
        if D >= want * 128:
            td = _round_up(pl.cdiv(D, want), 128)
            grid_d = pl.cdiv(D, td)
        elif B >= want * 8 and tb == B:
            tb = _round_up(pl.cdiv(B, want), 8)
            grid_b = pl.cdiv(B, tb)

    needs_b_mask = (grid_b * tb != B)
    kernel = _make_mmd_partial_kernel(tb, td, B, needs_b_mask)

    out_bytes = grid_d * grid_b * 8 * td * 4
    cost = pl.CostEstimate(flops=3 * B * D, transcendentals=0,
                           bytes_accessed=2 * B * D * itemsize + out_bytes)

    partials = pl.pallas_call(
        kernel,
        out_shape=jax.ShapeDtypeStruct((grid_d, grid_b, 8, td), jnp.float32),
        grid_spec=pltpu.PrefetchScalarGridSpec(
            num_scalar_prefetch=0,
            grid=(grid_d, grid_b),
            in_specs=[
                pl.BlockSpec((tb, td), lambda j, b: (b, j)),
                pl.BlockSpec((tb, td), lambda j, b: (b, j)),
            ],
            out_specs=pl.BlockSpec((1, 1, 8, td), lambda j, b: (j, b, 0, 0)),
        ),
        compiler_params=pltpu.CompilerParams(
            dimension_semantics=("parallel", "parallel"),
            vmem_limit_bytes=int(vmem_limit),
        ),
        cost_estimate=cost,
    )(x, y)

    # Tiny epilogue in plain JAX: finish the batch sum, take the mean diff,
    # mask the ragged feature tail (garbage lanes discarded by the select),
    # then square / reduce / sqrt.
    colsum = jnp.sum(partials, axis=(1, 2))            # (grid_d, td)
    diff = colsum * (1.0 / B)
    if grid_d * td != D:
        feat = jnp.arange(grid_d)[:, None] * td + jnp.arange(td)[None, :]
        diff = jnp.where(feat < D, diff, 0.0)
    return jnp.sqrt(jnp.sum(diff * diff))


def mmd_loss_ref(x, y):
    if x.ndim == 4:
        x = x.reshape(x.shape[0], -1)
        y = y.reshape(y.shape[0], -1)
    return jnp.sqrt(jnp.sum((jnp.mean(x, axis=0) - jnp.mean(y, axis=0)) ** 2))


if __name__ == "__main__":
    key = jax.random.PRNGKey(0)
    kx, ky = jax.random.split(key)
    # NCHW inputs, small shapes: batch=2, channels=4, spatial=16x16
    x = jax.random.normal(kx, (2, 4, 16, 16), dtype=jnp.float32)
    y = jax.random.normal(ky, (2, 4, 16, 16), dtype=jnp.float32)

    loss = jax.block_until_ready(mmd_loss_simple(x, y))
    ref = jax.block_until_ready(mmd_loss_ref(x, y))

    assert jnp.allclose(loss, ref, rtol=1e-5, atol=1e-5), (loss, ref)
    print("KERNEL_OK")
</pallas_src>

<mosaic_0001>
module attributes {stable_mosaic.version = 11 : i64} {
  func.func @kernel(%arg0: i32, %arg1: i32, %arg2: memref<2x256xf32, #tpu.memory_space<vmem>>, %arg3: memref<2x256xf32, #tpu.memory_space<vmem>>, %arg4: memref<1x1x8x256xf32, #tpu.memory_space<vmem>>) attributes {dimension_semantics = [#tpu.dimension_semantics<parallel>, #tpu.dimension_semantics<parallel>], iteration_bounds = array<i64: 4, 1>, scalar_prefetch = 0 : i64, scratch_operands = 0 : i64, tpu.core_type = #tpu.core_type<tc>, window_params = [{transform_indices = @transform_0, window_bounds = array<i64: 2, 256>}, {transform_indices = @transform_1, window_bounds = array<i64: 2, 256>}, {transform_indices = @transform_2, window_bounds = array<i64: 1, 1, 8, 256>}]} {
    %c0 = arith.constant 0 : index
    %c0_0 = arith.constant 0 : index
    %0 = vector.load %arg2[%c0, %c0_0] : memref<2x256xf32, #tpu.memory_space<vmem>>, vector<2x256xf32>
    %c0_1 = arith.constant 0 : index
    %c0_2 = arith.constant 0 : index
    %1 = vector.load %arg3[%c0_1, %c0_2] : memref<2x256xf32, #tpu.memory_space<vmem>>, vector<2x256xf32>
    %2 = arith.subf %0, %1 : vector<2x256xf32>
    %cst = arith.constant dense<0.000000e+00> : vector<256xf32>
    %3 = vector.multi_reduction <add>, %2, %cst [0] : vector<2x256xf32> to vector<256xf32>
    %4 = vector.shape_cast %3 : vector<256xf32> to vector<1x256xf32>
    %5 = tpu.iota {dimensions = array<i32: 0>} : vector<8x256xi32>
    %c0_i32 = arith.constant 0 : i32
    %6 = vector.broadcast %c0_i32 : i32 to vector<8x256xi32>
    %7 = arith.cmpi eq, %5, %6 : vector<8x256xi32>
    %cst_3 = arith.constant 0.000000e+00 : f32
    %8 = vector.shape_cast %4 : vector<1x256xf32> to vector<1x256xf32>
    %9 = vector.broadcast %8 : vector<1x256xf32> to vector<8x256xf32>
    %10 = vector.broadcast %cst_3 : f32 to vector<8x256xf32>
    %11 = arith.select %7, %9, %10 : vector<8x256xi1>, vector<8x256xf32>
    %12 = vector.shape_cast %11 : vector<8x256xf32> to vector<1x1x8x256xf32>
    %c0_4 = arith.constant 0 : index
    %c0_5 = arith.constant 0 : index
    %c0_6 = arith.constant 0 : index
    %c0_7 = arith.constant 0 : index
    %13 = vector.load %arg4[%c0_4, %c0_5, %c0_6, %c0_7] : memref<1x1x8x256xf32, #tpu.memory_space<vmem>>, vector<1x1x8x256xf32>
    tpu.vector_store %arg4[%c0_4, %c0_5, %c0_6, %c0_7], %12 {strides = array<i32>} : memref<1x1x8x256xf32, #tpu.memory_space<vmem>>, vector<1x1x8x256xf32>,
    return
  }
  func.func @transform_0(%arg0: i32, %arg1: i32) -> (i32, i32) {
    %c0_i32 = arith.constant 0 : i32
    return %arg1, %arg0 : i32, i32
  }
  func.func @transform_1(%arg0: i32, %arg1: i32) -> (i32, i32) {
    %c0_i32 = arith.constant 0 : i32
    return %arg1, %arg0 : i32, i32
  }
  func.func @transform_2(%arg0: i32, %arg1: i32) -> (i32, i32, i32, i32) {
    %c0_i32 = arith.constant 0 : i32
    %c0_i32_0 = arith.constant 0 : i32
    %c0_i32_1 = arith.constant 0 : i32
    return %arg0, %arg1, %c0_i32, %c0_i32_0 : i32, i32, i32, i32
  }
}

</mosaic_0001>

<llo_original>
// kernel: tpu_custom_call.1
$region0: #{tpu_custom_call.1}
  #allocation0 [shape = 'u32[]', space=smem, size = 0x4, offset = 0x4, fixed_abs, tag = 'smem constant byte address 0x4 - core index']
  #allocation1 [shape = 'u32[144,128]{1,0:T(1,128)}', space=vmem, size = 0x12000, scoped, tag = 'internal scratch']
  %s0 = inlined_call_operand.hbm [shape: f32[2,1024], index: 0, kind: input, shape index: {}]
  %s1 = inlined_call_operand.hbm [shape: f32[2,1024], index: 1, kind: input, shape index: {}]
  %s2 = inlined_call_operand.hbm [shape: f32[4,1,8,256], index: 2, kind: output, shape index: {}]
  %s3 = sld [smem:[#allocation0]]
  $region49: #{tpu_custom_call.1} parent=0
    _
  %s5 = ssub.s32 1, %s3
  %s6 = scalar_select 0, %s5, %s3
  $region1: #{tpu_custom_call.1} parent=0
    #allocation2 [shape = 'u8[4096]{0}', space=vmem, size = 0x1000, scoped, tag = 'input window, operand 0']
    #allocation3 [shape = 's32[2]{0}', space=sflag, size = 0x8, scoped, tag = 'scoped memory for tpu_custom_call.1']
    #allocation4 [shape = 's32[2]{0}', space=sflag, size = 0x8, scoped, tag = 'scoped memory for tpu_custom_call.1']
    #allocation5 [shape = 'u8[4096]{0}', space=vmem, size = 0x1000, scoped, tag = 'input window, operand 1']
    #allocation6 [shape = 's32[2]{0}', space=sflag, size = 0x8, scoped, tag = 'scoped memory for tpu_custom_call.1']
    #allocation7 [shape = 'u8[16384]{0}', space=vmem, size = 0x4000, scoped, tag = 'output window, operand 0']
    %7 = vsyncpa [#allocation3], 0
    %s8 = scalar_lea.sflag [#allocation3], 1
    %9 = vsyncpa %s8, 0
    %10 = vsyncpa [#allocation6], 0
    %s11 = scalar_lea.sflag [#allocation6], 1
    %12 = vsyncpa %s11, 0
    %13 = vsyncpa [#allocation4], 0
    %s14 = scalar_lea.sflag [#allocation4], 1
    %15 = vsyncpa %s14, 0
    loop: start=0, step=1, limit=6
    $region2: #{tpu_custom_call.1} parent=1 // loop_pre_header
      _
    $region3: #{tpu_custom_call.1} parent=1 // loop_header
      %s17 = sphi 0, %s21
      %p18 = scmp.ge.s32.totalorder %s17, 6
      %s24 = sphi 0, %s36
      %s25 = sphi 0, %s32
      %s26 = sphi 0, %s24
      %s27 = sphi 0, %s25
      %s28 = sphi 0, %s26
      %s29 = sphi 0, %s27
      %s41 = sphi 0, %s43
      %s44 = sphi 0, %s41
      %s45 = sphi 0, %s44
      %s61 = sphi 0, %s45
      %s69 = sphi 0, %s71
      %s72 = sphi 0, %s69
      %s73 = sphi 0, %s72
      %s89 = sphi 0, %s73
      %s97 = sphi 0, %s99
      %s100 = sphi 0, %s97
      %s101 = sphi 0, %s100
      %s117 = sphi 0, %s101
    $region4: #{tpu_custom_call.1} parent=1 // loop_header_branch
      %20 = sbr.rel (%p18) target = $region8
    $region5: #{tpu_custom_call.1} parent=1 // loop_body
      %s22 = ssub.s32 %s17, 1
      %s23 = ssub.s32 %s17, 2
      %s30 = sadd.s32 1, %s25
      %p31 = scmp.ge.s32.totalorder %s30, 1
      %s32 = scalar_select %p31, 0, %s30
      %s33 = sadd.s32 1, %s24
      %s34 = scalar_select %p31, %s33, %s24
      %p35 = scmp.ge.s32.totalorder %s34, 4
      %s36 = scalar_select %p35, 0, %s34
      %s37 = ssub.s32 %s25, %s32
      %s38 = ssub.s32 %s24, %s36
      %s39 = sor.u32 %s37, %s38
      %p40 = scmp.eq.s32.totalorder %s39, 0
      %s42 = sadd.s32 %s41, 1
      %s43 = scalar_select %p40, %s41, %s42
      %p46 = pneg %p40
      %p47 = scmp.eq.s32.totalorder %s17, 3
      %p48 = por %p46, %p47
      %p49 = scmp.ne.s32.totalorder %s41, %s44
      %p50 = scmp.eq.s32.totalorder %s17, 0
      %p51 = por %p49, %p50
      %p52 = scmp.ne.s32.totalorder %s41, %s44
      %p53 = scmp.eq.s32.totalorder %s22, 3
      %p54 = por %p52, %p53
      %p55 = scmp.ne.s32.totalorder %s44, %s45
      %p56 = scmp.eq.s32.totalorder %s22, 0
      %p57 = por %p55, %p56
      %p58 = scmp.ne.s32.totalorder %s44, %s45
      %p59 = scmp.eq.s32.totalorder %s23, 3
      %p60 = por %p58, %p59
      %p62 = scmp.ne.s32.totalorder %s45, %s61
      %p63 = scmp.eq.s32.totalorder %s23, 0
      %p64 = por %p62, %p63
      %s65 = ssub.s32 %s25, %s32
      %s66 = ssub.s32 %s24, %s36
      %s67 = sor.u32 %s65, %s66
      %p68 = scmp.eq.s32.totalorder %s67, 0
      %s70 = sadd.s32 %s69, 1
      %s71 = scalar_select %p68, %s69, %s70
      %p74 = pneg %p68
      %p75 = scmp.eq.s32.totalorder %s17, 3
      %p76 = por %p74, %p75
      %p77 = scmp.ne.s32.totalorder %s69, %s72
      %p78 = scmp.eq.s32.totalorder %s17, 0
      %p79 = por %p77, %p78
      %p80 = scmp.ne.s32.totalorder %s69, %s72
      %p81 = scmp.eq.s32.totalorder %s22, 3
      %p82 = por %p80, %p81
      %p83 = scmp.ne.s32.totalorder %s72, %s73
      %p84 = scmp.eq.s32.totalorder %s22, 0
      %p85 = por %p83, %p84
      %p86 = scmp.ne.s32.totalorder %s72, %s73
      %p87 = scmp.eq.s32.totalorder %s23, 3
      %p88 = por %p86, %p87
      %p90 = scmp.ne.s32.totalorder %s73, %s89
      %p91 = scmp.eq.s32.totalorder %s23, 0
      %p92 = por %p90, %p91
      %s93 = ssub.s32 %s24, %s36
      %s94 = ssub.s32 %s25, %s32
      %s95 = sor.u32 %s93, %s94
      %p96 = scmp.eq.s32.totalorder %s95, 0
      %s98 = sadd.s32 %s97, 1
      %s99 = scalar_select %p96, %s97, %s98
      %p102 = pneg %p96
      %p103 = scmp.eq.s32.totalorder %s17, 3
      %p104 = por %p102, %p103
      %p105 = scmp.ne.s32.totalorder %s97, %s100
      %p106 = scmp.eq.s32.totalorder %s17, 0
      %p107 = por %p105, %p106
      %p108 = scmp.ne.s32.totalorder %s97, %s100
      %p109 = scmp.eq.s32.totalorder %s22, 3
      %p110 = por %p108, %p109
      %p111 = scmp.ne.s32.totalorder %s100, %s101
      %p112 = scmp.eq.s32.totalorder %s22, 0
      %p113 = por %p111, %p112
      %p114 = scmp.ne.s32.totalorder %s100, %s101
      %p115 = scmp.eq.s32.totalorder %s23, 3
      %p116 = por %p114, %p115
      %p118 = scmp.ne.s32.totalorder %s101, %s117
      %p119 = scmp.eq.s32.totalorder %s23, 0
      %p120 = por %p118, %p119
      %p121 = scmp.le.s32.totalorder 1, %s17
      %p122 = scmp.lt.s32.totalorder %s17, 5
      %p123 = pnand %p121, %p122
      %p124 = pneg %p123
      // Predicated region
      $region9: #{tpu_custom_call.1} parent=5 // pred_check
        _
      $region10: #{tpu_custom_call.1} parent=5 // pred_check_branch
        %126 = sbr.rel (%p123) target = $region12
      $region11: #{tpu_custom_call.1} parent=5 // pred_region
        %s127 = ssub.s32 %s17, 1
      $region12: #{tpu_custom_call.1} parent=5 // pred_fallthru
        _
      %p128 = scmp.lt.s32.totalorder %s17, 4
      // Predicated region
      $region13: #{tpu_custom_call.1} parent=5 // pred_check
        %p129 = pneg %p128
      $region14: #{tpu_custom_call.1} parent=5 // pred_check_branch
        %131 = sbr.rel (%p129) target = $region16
      $region15: #{tpu_custom_call.1} parent=5 // pred_region
        // Predicated region
        $region17: #{tpu_custom_call.1} parent=15 // pred_check
          %p132 = pneg %p51
        $region18: #{tpu_custom_call.1} parent=15 // pred_check_branch
          %134 = sbr.rel (%p132) target = $region20
        $region19: #{tpu_custom_call.1} parent=15 // pred_region
          %s135 = sand.u32 %s41, 1
          %s136 = scalar_lea.sflag [#allocation3], %s135
          %s137 = sand.u32 %s41, 1
          %s138 = smul.addr %s137, 4
          %s139 = scalar_lea.vmem [#allocation2], %s138
          %s140 = smul.u32 2, %s24
          %s142 = ssub.s32 64, 64
          %143 = vsyncadd %s136, %s142
          %s144 = smul.addr %s25, 8
          %s145 = sadd.s32 %s140, %s144
          %s146 = smul.addr %s145, 32
          %s147 = scalar_lea.hbm %s0, %s146
          %s149 = sshll.u32 %s139, 4
          %s150 = int_to_ptr.vmem [resolvable:$true] %s149
          %152 = dma.hbm_to_vmem [thread:$0]  %s147, 64, %s150, %s136
        $region20: #{tpu_custom_call.1} parent=15 // pred_fallthru
          _
        // Predicated region
        $region21: #{tpu_custom_call.1} parent=15 // pred_check
          %p153 = pneg %p79
        $region22: #{tpu_custom_call.1} parent=15 // pred_check_branch
          %155 = sbr.rel (%p153) target = $region24
        $region23: #{tpu_custom_call.1} parent=15 // pred_region
          %s156 = sand.u32 %s69, 1
          %s157 = scalar_lea.sflag [#allocation6], %s156
          %s158 = sand.u32 %s69, 1
          %s159 = smul.addr %s158, 4
          %s160 = scalar_lea.vmem [#allocation5], %s159
          %s161 = smul.u32 2, %s24
          %s163 = ssub.s32 64, 64
          %164 = vsyncadd %s157, %s163
          %s165 = smul.addr %s25, 8
          %s166 = sadd.s32 %s161, %s165
          %s167 = smul.addr %s166, 32
          %s168 = scalar_lea.hbm %s1, %s167
          %s170 = sshll.u32 %s160, 4
          %s171 = int_to_ptr.vmem [resolvable:$true] %s170
          %173 = dma.hbm_to_vmem [thread:$0]  %s168, 64, %s171, %s157
        $region24: #{tpu_custom_call.1} parent=15 // pred_fallthru
          _
      $region16: #{tpu_custom_call.1} parent=5 // pred_fallthru
        _
      %p174 = scmp.le.s32.totalorder 1, %s17
      %p175 = scmp.lt.s32.totalorder %s17, 5
      %p176 = pnand %p174, %p175
      %p177 = pneg %p176
      // Predicated region
      $region25: #{tpu_custom_call.1} parent=5 // pred_check
        _
      $region26: #{tpu_custom_call.1} parent=5 // pred_check_branch
        %179 = sbr.rel (%p176) target = $region28
      $region27: #{tpu_custom_call.1} parent=5 // pred_region
        %s180 = ssub.s32 %s17, 1
        %s181 = sand.u32 %s44, 1
        %s182 = scalar_lea.sflag [#allocation3], %s181
        %s183 = sand.u32 %s44, 1
        %s184 = smul.addr %s183, 4
        %s185 = scalar_lea.vmem [#allocation2], %s184
        // Predicated region
        $region29: #{tpu_custom_call.1} parent=27 // pred_check
          %p186 = pneg %p57
        $region30: #{tpu_custom_call.1} parent=27 // pred_check_branch
          %188 = sbr.rel (%p186) target = $region32
        $region31: #{tpu_custom_call.1} parent=27 // pred_region
          %189 = dma.done %s182, 64
        $region32: #{tpu_custom_call.1} parent=27 // pred_fallthru
          _
        %s190 = sand.u32 %s72, 1
        %s191 = scalar_lea.sflag [#allocation6], %s190
        %s192 = sand.u32 %s72, 1
        %s193 = smul.addr %s192, 4
        %s194 = scalar_lea.vmem [#allocation5], %s193
        // Predicated region
        $region33: #{tpu_custom_call.1} parent=27 // pred_check
          %p195 = pneg %p85
        $region34: #{tpu_custom_call.1} parent=27 // pred_check_branch
          %197 = sbr.rel (%p195) target = $region36
        $region35: #{tpu_custom_call.1} parent=27 // pred_region
          %198 = dma.done %s191, 64
        $region36: #{tpu_custom_call.1} parent=27 // pred_fallthru
          _
        %s199 = sand.u32 %s44, 1
        %s200 = scalar_lea.sflag [#allocation3], %s199
        %s201 = sand.u32 %s44, 1
        %s202 = smul.addr %s201, 4
        %s203 = scalar_lea.vmem [#allocation2], %s202
        %p204 = pneg %p57
        %p205 = pneg %p54
        %s206 = sand.u32 %s72, 1
        %s207 = scalar_lea.sflag [#allocation6], %s206
        %s208 = sand.u32 %s72, 1
        %s209 = smul.addr %s208, 4
        %s210 = scalar_lea.vmem [#allocation5], %s209
        %p211 = pneg %p85
        %p212 = pneg %p82
        %p213 = pneg %p113
        %p214 = pneg %p110
        %s215 = sand.u32 %s100, 1
        %s216 = scalar_lea.sflag [#allocation4], %s215
        %s217 = sand.u32 %s100, 1
        %s218 = smul.addr %s217, 16
        %s219 = scalar_lea.vmem [#allocation7], %s218
        %s220 = smul.u32 2, %s26
        %s221 = smul.u32 2, %s26
        %v222 = vld [vmem:[%s185] sm:$0xf]
        %v223 = vld [vmem:[%s194] sm:$0xf]
        %v224 = vsub.f32 %v222, %v223
        %v227 = vunpack.c.l.s4 1983009808
        %v228 = vunpack.c.0.s8 %v227
        %v229 = vlaneseq
        %v230 = vshrl.u32 %v229, 7
        %v231 = vsub.s32 %v228, %v230
        %v232 = vrot.slane %v224, %v231
        %v233 = vcombine.high %v232, %v232
        %vm236 = vcmask 1041408
        %v237 = vsel %vm236, %v232, 0.0
        %v238 = vrot.slane %v237, 4
        %v239 = vadd.f32 %v237, %v238
        %v240 = vrot.slane %v239, 2
        %v241 = vadd.f32 %v239, %v240
        %v242 = vrot.slane %v241, 1
        %v243 = vadd.f32 %v241, %v242
        %v244 = vsel %vm236, %v233, 0.0
        %v245 = vrot.slane %v244, 4
        %v246 = vadd.f32 %v244, %v245
        %v247 = vrot.slane %v246, 2
        %v248 = vadd.f32 %v246, %v247
        %v249 = vrot.slane %v248, 1
        %v250 = vadd.f32 %v248, %v249
        %v251 = vlaneseq
        %v252 = vshrl.u32 %v251, 7
        %vm253 = vcmp.eq.s32.totalorder %v252, 0
        %v254 = vsel %vm253, %v243, 0.0
        %v255 = vsel %vm253, %v250, 0.0
        %256 = vst [vmem:[%s219] sm:$0xff] %v254
        %257 = vst [vmem:[%s219 + $0x8] sm:$0xff] %v255
        %s258 = sand.u32 %s100, 1
        %s259 = scalar_lea.sflag [#allocation4], %s258
        %s260 = sand.u32 %s100, 1
        %s261 = smul.addr %s260, 16
        %s262 = scalar_lea.vmem [#allocation7], %s261
        // Predicated region
        $region37: #{tpu_custom_call.1} parent=27 // pred_check
          %p263 = pneg %p110
        $region38: #{tpu_custom_call.1} parent=27 // pred_check_branch
          %265 = sbr.rel (%p263) target = $region40
        $region39: #{tpu_custom_call.1} parent=27 // pred_region
          %s267 = ssub.s32 256, 256
          %268 = vsyncadd %s259, %s267
          %s269 = smul.addr %s27, 2
          %s270 = smul.addr %s26, 2
          %s271 = sadd.s32 %s269, %s270
          %s272 = smul.addr %s271, 128
          %s273 = scalar_lea.hbm %s2, %s272
          %s275 = sshll.u32 %s262, 4
          %s276 = int_to_ptr.vmem [resolvable:$true] %s275
          %278 = dma.vmem_to_hbm [thread:$0]  %s276, 256, %s273, %s259
        $region40: #{tpu_custom_call.1} parent=27 // pred_fallthru
          _
      $region28: #{tpu_custom_call.1} parent=5 // pred_fallthru
        _
      %p279 = scmp.le.s32.totalorder 2, %s17
      // Predicated region
      $region41: #{tpu_custom_call.1} parent=5 // pred_check
        %p280 = pneg %p279
      $region42: #{tpu_custom_call.1} parent=5 // pred_check_branch
        %282 = sbr.rel (%p280) target = $region44
      $region43: #{tpu_custom_call.1} parent=5 // pred_region
        %s283 = ssub.s32 %s17, 2
        // Predicated region
        $region45: #{tpu_custom_call.1} parent=43 // pred_check
          %p284 = pneg %p116
        $region46: #{tpu_custom_call.1} parent=43 // pred_check_branch
          %286 = sbr.rel (%p284) target = $region48
        $region47: #{tpu_custom_call.1} parent=43 // pred_region
          %s287 = sand.u32 %s101, 1
          %s288 = scalar_lea.sflag [#allocation4], %s287
          %s289 = sand.u32 %s101, 1
          %s290 = smul.addr %s289, 16
          %s291 = scalar_lea.vmem [#allocation7], %s290
          %292 = dma.done %s288, 256
        $region48: #{tpu_custom_call.1} parent=43 // pred_fallthru
          _
      $region44: #{tpu_custom_call.1} parent=5 // pred_fallthru
        _
    $region6: #{tpu_custom_call.1} parent=1 // loop_footer
      %s21 = sadd.s32 1, %s17
    $region7: #{tpu_custom_call.1} parent=1 // loop_footer_branch
      %16 = sbr.rel target = $region3
    $region8: #{tpu_custom_call.1} parent=1 // loop_exit
      _
    %293 = vsyncpa [#allocation3], 1
    %s294 = scalar_lea.sflag [#allocation3], 1
    %295 = vsyncpa %s294, 1
    %296 = vsyncpa [#allocation6], 1
    %s297 = scalar_lea.sflag [#allocation6], 1
    %298 = vsyncpa %s297, 1
    %299 = vsyncpa [#allocation4], 1
    %s300 = scalar_lea.sflag [#allocation4], 1
    %301 = vsyncpa %s300, 1

</llo_original>
